<compile_context>
chip_gen: v5e
topology: v5e:2x2
jax: 0.10.0
libtpu: 0.0.40
codegen_flags: <defaults>
</compile_context>

<pallas_src>
import math

import jax
import jax.numpy as jnp
from jax import lax
from jax.experimental import pallas as pl
from jax.experimental.pallas import tpu as pltpu

_SUBLANE = 8


def _round_up(x, m):
    return (x + m - 1) // m * m


def _attn_mlp_kernel(x_ref, w_attn_ref, b_attn_ref,
                     w_fc1_ref, b_fc1_ref,
                     w_head_ref, b_head_ref,
                     attn_out_ref, head_out_ref):
    # All ops below are row-wise, so garbage rows in a trailing partial batch
    # block stay confined to rows whose output writes Pallas masks off.
    x = x_ref[...]  # [tb, D] f32

    # attention_layer(x) -> softmax over the feature dim (dim=1).
    logits = jnp.dot(x, w_attn_ref[...],
                     preferred_element_type=jnp.float32) + b_attn_ref[...]
    m = jnp.max(logits, axis=1, keepdims=True)
    e = jnp.exp(logits - m)
    denom = jnp.sum(e, axis=1, keepdims=True)
    attn = e * pl.reciprocal(denom, approx=False)

    # weighted_x = x * attention_weights
    wx = x * attn

    # fc1 + exact GELU (PyTorch F.gelu default uses erf).
    h = jnp.dot(wx, w_fc1_ref[...],
                preferred_element_type=jnp.float32) + b_fc1_ref[...]
    h = 0.5 * h * (1.0 + lax.erf(h * (1.0 / math.sqrt(2.0))))

    # Fused heads: [cls | aux_cls_1 | aux_cls_2 | reg_1 | reg_2 | reg_3]
    out = jnp.dot(h, w_head_ref[...],
                  preferred_element_type=jnp.float32) + b_head_ref[...]

    attn_out_ref[...] = attn.astype(attn_out_ref.dtype)
    head_out_ref[...] = out.astype(head_out_ref.dtype)


def _choose_batch_tile(B, block_b):
    """Pick (tile_rows, num_grid_steps) for the batch axis."""
    if B > block_b:
        tb = block_b                      # multiple of 8 (asserted by caller)
        return tb, pl.cdiv(B, tb)
    if B >= 256:
        # Split into >=2 grid steps so the "parallel" batch axis can shard
        # across both TensorCores on v7x; also caps per-step VMEM.
        tb = _round_up((B + 1) // 2, _SUBLANE)
        return tb, pl.cdiv(B, tb)
    # Single full-extent block (legal even when B is not a multiple of 8).
    return B, 1


def attn_mlp_forward(x, params, *, block_b=1024):
    """x: [B, D] float32. params: dict from init_params (real, unpadded sizes)."""
    assert block_b % _SUBLANE == 0, "block_b must be a multiple of 8"
    B, D = x.shape
    w_attn = params["w_attn"]
    b_attn = params["b_attn"]
    w_fc1 = params["w_fc1"]
    b_fc1 = params["b_fc1"]
    w_head = params["w_head"]
    b_head = params["b_head"]

    H = w_fc1.shape[1]
    N = w_head.shape[1]

    tb, nb = _choose_batch_tile(B, block_b)

    flops = 2 * B * (D * D + D * H + H * N)
    transcendentals = B * (D + H)  # exp + erf
    bytes_accessed = 4 * (x.size + w_attn.size + b_attn.size + w_fc1.size
                          + b_fc1.size + w_head.size + b_head.size
                          + B * D + B * N)

    attn_w, head = pl.pallas_call(
        _attn_mlp_kernel,
        out_shape=(
            jax.ShapeDtypeStruct((B, D), jnp.float32),
            jax.ShapeDtypeStruct((B, N), jnp.float32),
        ),
        grid=(nb,),
        in_specs=[
            pl.BlockSpec((tb, D), lambda i: (i, 0)),   # x tile (streamed)
            pl.BlockSpec((D, D), lambda i: (0, 0)),    # w_attn (resident)
            pl.BlockSpec((1, D), lambda i: (0, 0)),    # b_attn
            pl.BlockSpec((D, H), lambda i: (0, 0)),    # w_fc1 (resident)
            pl.BlockSpec((1, H), lambda i: (0, 0)),    # b_fc1
            pl.BlockSpec((H, N), lambda i: (0, 0)),    # w_head (resident)
            pl.BlockSpec((1, N), lambda i: (0, 0)),    # b_head
        ],
        out_specs=(
            pl.BlockSpec((tb, D), lambda i: (i, 0)),   # attention weights
            pl.BlockSpec((tb, N), lambda i: (i, 0)),   # fused head outputs
        ),
        compiler_params=pltpu.CompilerParams(
            dimension_semantics=("parallel",)),
        cost_estimate=pl.CostEstimate(
            flops=flops, transcendentals=transcendentals,
            bytes_accessed=bytes_accessed),
    )(x, w_attn, b_attn, w_fc1, b_fc1, w_head, b_head)

    # Split fused heads (tiny [B, 11] array; negligible HBM traffic):
    # cls(cls_type) | aux1(2) | aux2(2) | reg1(1) | reg2(1) | reg3(1)
    cls_type = params["cls_type"]
    o = 0
    cls_out = head[:, o:o + cls_type]; o += cls_type
    aux_cls_out_1 = head[:, o:o + 2]; o += 2
    aux_cls_out_2 = head[:, o:o + 2]; o += 2
    reg_out_1 = head[:, o:o + 1]; o += 1
    reg_out_2 = head[:, o:o + 1]; o += 1
    reg_out_3 = head[:, o:o + 1]; o += 1

    return (cls_out, aux_cls_out_1, aux_cls_out_2,
            reg_out_1, reg_out_2, reg_out_3, attn_w)


def init_params(key, input_dim, hidden, cls_type):
    """Deterministic synthetic parameters.  Linear weights stored as
    [in_features, out_features] (PyTorch weight transposed).  The six head
    layers are fused into one [hidden, n_out] weight for a single matmul."""
    ks = jax.random.split(key, 16)

    def lin(kw, kb, fin, fout):
        bound = 1.0 / math.sqrt(fin)
        w = jax.random.uniform(kw, (fin, fout), jnp.float32, -bound, bound)
        b = jax.random.uniform(kb, (1, fout), jnp.float32, -bound, bound)
        return w, b

    w_attn, b_attn = lin(ks[0], ks[1], input_dim, input_dim)
    w_fc1, b_fc1 = lin(ks[2], ks[3], input_dim, hidden)
    heads = [lin(ks[4], ks[5], hidden, cls_type),
             lin(ks[6], ks[7], hidden, 2),
             lin(ks[8], ks[9], hidden, 2),
             lin(ks[10], ks[11], hidden, 1),
             lin(ks[12], ks[13], hidden, 1),
             lin(ks[14], ks[15], hidden, 1)]
    w_head = jnp.concatenate([w for w, _ in heads], axis=1)
    b_head = jnp.concatenate([b for _, b in heads], axis=1)

    return {
        "w_attn": w_attn, "b_attn": b_attn,
        "w_fc1": w_fc1, "b_fc1": b_fc1,
        "w_head": w_head, "b_head": b_head,
        "cls_type": cls_type, "n_head_out": w_head.shape[1],
    }


def _reference(x, p):
    """Pure-JAX reference for correctness checking."""
    logits = x @ p["w_attn"] + p["b_attn"]
    attn = jax.nn.softmax(logits, axis=1)
    wx = x * attn
    h = wx @ p["w_fc1"] + p["b_fc1"]
    h = 0.5 * h * (1.0 + lax.erf(h / math.sqrt(2.0)))
    out = h @ p["w_head"] + p["b_head"]
    return attn, out


if __name__ == "__main__":
    B, input_dim, hidden, cls_type = 8, 32, 32, 4

    key = jax.random.PRNGKey(0)
    k_x, k_p = jax.random.split(key)
    x = jax.random.normal(k_x, (B, input_dim), dtype=jnp.float32)
    params = init_params(k_p, input_dim, hidden, cls_type)

    outs = attn_mlp_forward(x, params)
    outs = jax.block_until_ready(outs)

    # Sanity check against the pure-JAX reference.
    attn_ref, head_ref = _reference(x, params)
    cls_out, aux1, aux2, r1, r2, r3, attn_w = outs
    head_cat = jnp.concatenate([cls_out, aux1, aux2, r1, r2, r3], axis=1)
    assert jnp.allclose(attn_w, attn_ref, atol=1e-5), "attention mismatch"
    assert jnp.allclose(head_cat, head_ref, atol=1e-5), "head output mismatch"

    print("KERNEL_OK")
</pallas_src>

<mosaic_0001>
module attributes {stable_mosaic.version = 11 : i64} {
  func.func @_attn_mlp_kernel(%arg0: i32, %arg1: memref<8x32xf32, #tpu.memory_space<vmem>>, %arg2: memref<32x32xf32, #tpu.memory_space<vmem>>, %arg3: memref<1x32xf32, #tpu.memory_space<vmem>>, %arg4: memref<32x32xf32, #tpu.memory_space<vmem>>, %arg5: memref<1x32xf32, #tpu.memory_space<vmem>>, %arg6: memref<32x11xf32, #tpu.memory_space<vmem>>, %arg7: memref<1x11xf32, #tpu.memory_space<vmem>>, %arg8: memref<8x32xf32, #tpu.memory_space<vmem>>, %arg9: memref<8x11xf32, #tpu.memory_space<vmem>>) attributes {dimension_semantics = [#tpu.dimension_semantics<parallel>], iteration_bounds = array<i64: 1>, scalar_prefetch = 0 : i64, scratch_operands = 0 : i64, tpu.core_type = #tpu.core_type<tc>, window_params = [{transform_indices = @transform_0, window_bounds = array<i64: 8, 32>}, {pipeline_mode = #tpu.pipeline_mode<synchronous>, transform_indices = @transform_1, window_bounds = array<i64: 32, 32>}, {pipeline_mode = #tpu.pipeline_mode<synchronous>, transform_indices = @transform_2, window_bounds = array<i64: 1, 32>}, {pipeline_mode = #tpu.pipeline_mode<synchronous>, transform_indices = @transform_3, window_bounds = array<i64: 32, 32>}, {pipeline_mode = #tpu.pipeline_mode<synchronous>, transform_indices = @transform_4, window_bounds = array<i64: 1, 32>}, {pipeline_mode = #tpu.pipeline_mode<synchronous>, transform_indices = @transform_5, window_bounds = array<i64: 32, 11>}, {pipeline_mode = #tpu.pipeline_mode<synchronous>, transform_indices = @transform_6, window_bounds = array<i64: 1, 11>}, {transform_indices = @transform_7, window_bounds = array<i64: 8, 32>}, {transform_indices = @transform_8, window_bounds = array<i64: 8, 11>}]} {
    %c0 = arith.constant 0 : index
    %c0_0 = arith.constant 0 : index
    %0 = vector.load %arg1[%c0, %c0_0] : memref<8x32xf32, #tpu.memory_space<vmem>>, vector<8x32xf32>
    %c0_1 = arith.constant 0 : index
    %c0_2 = arith.constant 0 : index
    %1 = vector.load %arg2[%c0_1, %c0_2] : memref<32x32xf32, #tpu.memory_space<vmem>>, vector<32x32xf32>
    %cst = arith.constant dense<0.000000e+00> : vector<8x32xf32>
    %2 = tpu.matmul %0, %1, %cst {dimension_numbers = #tpu.dot_dimension_numbers<[1], [0], [0], [1], [0, 0, 1, 1], [], []>} : vector<8x32xf32>, vector<32x32xf32>, vector<8x32xf32> -> vector<8x32xf32>
    %c0_3 = arith.constant 0 : index
    %c0_4 = arith.constant 0 : index
    %3 = vector.load %arg3[%c0_3, %c0_4] : memref<1x32xf32, #tpu.memory_space<vmem>>, vector<1x32xf32>
    %4 = vector.broadcast %3 : vector<1x32xf32> to vector<8x32xf32>
    %5 = arith.addf %2, %4 : vector<8x32xf32>
    %cst_5 = arith.constant dense<0xFF800000> : vector<8xf32>
    %6 = vector.multi_reduction <maximumf>, %5, %cst_5 [1] : vector<8x32xf32> to vector<8xf32>
    %7 = vector.shape_cast %6 : vector<8xf32> to vector<8x1xf32>
    %8 = vector.broadcast %7 : vector<8x1xf32> to vector<8x32xf32>
    %9 = arith.subf %5, %8 : vector<8x32xf32>
    %10 = math.exp %9 : vector<8x32xf32>
    %cst_6 = arith.constant dense<0.000000e+00> : vector<8xf32>
    %11 = vector.multi_reduction <add>, %10, %cst_6 [1] : vector<8x32xf32> to vector<8xf32>
    %12 = vector.shape_cast %11 : vector<8xf32> to vector<8x1xf32>
    %13 = tpu.reciprocal %12 : vector<8x1xf32> -> vector<8x1xf32>
    %14 = vector.broadcast %13 : vector<8x1xf32> to vector<8x32xf32>
    %15 = arith.mulf %10, %14 : vector<8x32xf32>
    %16 = arith.mulf %0, %15 : vector<8x32xf32>
    %c0_7 = arith.constant 0 : index
    %c0_8 = arith.constant 0 : index
    %17 = vector.load %arg4[%c0_7, %c0_8] : memref<32x32xf32, #tpu.memory_space<vmem>>, vector<32x32xf32>
    %cst_9 = arith.constant dense<0.000000e+00> : vector<8x32xf32>
    %18 = tpu.matmul %16, %17, %cst_9 {dimension_numbers = #tpu.dot_dimension_numbers<[1], [0], [0], [1], [0, 0, 1, 1], [], []>} : vector<8x32xf32>, vector<32x32xf32>, vector<8x32xf32> -> vector<8x32xf32>
    %c0_10 = arith.constant 0 : index
    %c0_11 = arith.constant 0 : index
    %19 = vector.load %arg5[%c0_10, %c0_11] : memref<1x32xf32, #tpu.memory_space<vmem>>, vector<1x32xf32>
    %20 = vector.broadcast %19 : vector<1x32xf32> to vector<8x32xf32>
    %21 = arith.addf %18, %20 : vector<8x32xf32>
    %cst_12 = arith.constant 5.000000e-01 : f32
    %22 = vector.broadcast %cst_12 : f32 to vector<8x32xf32>
    %23 = arith.mulf %22, %21 : vector<8x32xf32>
    %cst_13 = arith.constant 0.707106769 : f32
    %24 = vector.broadcast %cst_13 : f32 to vector<8x32xf32>
    %25 = arith.mulf %21, %24 : vector<8x32xf32>
    %26 = math.erf %25 : vector<8x32xf32>
    %cst_14 = arith.constant 1.000000e+00 : f32
    %27 = vector.broadcast %cst_14 : f32 to vector<8x32xf32>
    %28 = arith.addf %27, %26 : vector<8x32xf32>
    %29 = arith.mulf %23, %28 : vector<8x32xf32>
    %c0_15 = arith.constant 0 : index
    %c0_16 = arith.constant 0 : index
    %30 = vector.load %arg6[%c0_15, %c0_16] : memref<32x11xf32, #tpu.memory_space<vmem>>, vector<32x11xf32>
    %cst_17 = arith.constant dense<0.000000e+00> : vector<8x11xf32>
    %31 = tpu.matmul %29, %30, %cst_17 {dimension_numbers = #tpu.dot_dimension_numbers<[1], [0], [0], [1], [0, 0, 1, 1], [], []>} : vector<8x32xf32>, vector<32x11xf32>, vector<8x11xf32> -> vector<8x11xf32>
    %c0_18 = arith.constant 0 : index
    %c0_19 = arith.constant 0 : index
    %32 = vector.load %arg7[%c0_18, %c0_19] : memref<1x11xf32, #tpu.memory_space<vmem>>, vector<1x11xf32>
    %33 = vector.broadcast %32 : vector<1x11xf32> to vector<8x11xf32>
    %34 = arith.addf %31, %33 : vector<8x11xf32>
    %c0_20 = arith.constant 0 : index
    %c0_21 = arith.constant 0 : index
    %35 = vector.load %arg8[%c0_20, %c0_21] : memref<8x32xf32, #tpu.memory_space<vmem>>, vector<8x32xf32>
    tpu.vector_store %arg8[%c0_20, %c0_21], %15 {strides = array<i32>} : memref<8x32xf32, #tpu.memory_space<vmem>>, vector<8x32xf32>,
    %c0_22 = arith.constant 0 : index
    %c0_23 = arith.constant 0 : index
    %36 = vector.load %arg9[%c0_22, %c0_23] : memref<8x11xf32, #tpu.memory_space<vmem>>, vector<8x11xf32>
    tpu.vector_store %arg9[%c0_22, %c0_23], %34 {strides = array<i32>} : memref<8x11xf32, #tpu.memory_space<vmem>>, vector<8x11xf32>,
    return
  }
  func.func @transform_0(%arg0: i32) -> (i32, i32) {
    %c0_i32 = arith.constant 0 : i32
    %c0_i32_0 = arith.constant 0 : i32
    return %arg0, %c0_i32 : i32, i32
  }
  func.func @transform_1(%arg0: i32) -> (i32, i32) {
    %c0_i32 = arith.constant 0 : i32
    %c0_i32_0 = arith.constant 0 : i32
    %c0_i32_1 = arith.constant 0 : i32
    return %c0_i32, %c0_i32_0 : i32, i32
  }
  func.func @transform_2(%arg0: i32) -> (i32, i32) {
    %c0_i32 = arith.constant 0 : i32
    %c0_i32_0 = arith.constant 0 : i32
    %c0_i32_1 = arith.constant 0 : i32
    return %c0_i32, %c0_i32_0 : i32, i32
  }
  func.func @transform_3(%arg0: i32) -> (i32, i32) {
    %c0_i32 = arith.constant 0 : i32
    %c0_i32_0 = arith.constant 0 : i32
    %c0_i32_1 = arith.constant 0 : i32
    return %c0_i32, %c0_i32_0 : i32, i32
  }
  func.func @transform_4(%arg0: i32) -> (i32, i32) {
    %c0_i32 = arith.constant 0 : i32
    %c0_i32_0 = arith.constant 0 : i32
    %c0_i32_1 = arith.constant 0 : i32
    return %c0_i32, %c0_i32_0 : i32, i32
  }
  func.func @transform_5(%arg0: i32) -> (i32, i32) {
    %c0_i32 = arith.constant 0 : i32
    %c0_i32_0 = arith.constant 0 : i32
    %c0_i32_1 = arith.constant 0 : i32
    return %c0_i32, %c0_i32_0 : i32, i32
  }
  func.func @transform_6(%arg0: i32) -> (i32, i32) {
    %c0_i32 = arith.constant 0 : i32
    %c0_i32_0 = arith.constant 0 : i32
    %c0_i32_1 = arith.constant 0 : i32
    return %c0_i32, %c0_i32_0 : i32, i32
  }
  func.func @transform_7(%arg0: i32) -> (i32, i32) {
    %c0_i32 = arith.constant 0 : i32
    %c0_i32_0 = arith.constant 0 : i32
    return %arg0, %c0_i32 : i32, i32
  }
  func.func @transform_8(%arg0: i32) -> (i32, i32) {
    %c0_i32 = arith.constant 0 : i32
    %c0_i32_0 = arith.constant 0 : i32
    return %arg0, %c0_i32 : i32, i32
  }
}

</mosaic_0001>

<llo_original>
// kernel: tpu_custom_call.1
$region0: #{tpu_custom_call.1}
  #allocation0 [shape = 'u32[]', space=smem, size = 0x4, offset = 0x4, fixed_abs, tag = 'smem constant byte address 0x4 - core index']
  #allocation1 [shape = 'u32[72,128]{1,0:T(1,128)}', space=vmem, size = 0x9000, scoped, tag = 'internal scratch']
  %s0 = inlined_call_operand.vmem [shape: f32[8,32], index: 0, kind: input, shape index: {}]
  %s1 = inlined_call_operand.vmem [shape: f32[32,32], index: 1, kind: input, shape index: {}]
  %s2 = inlined_call_operand.vmem [shape: f32[1,32], index: 2, kind: input, shape index: {}]
  %s3 = inlined_call_operand.hbm [shape: f32[32,32], index: 3, kind: input, shape index: {}]
  %s4 = inlined_call_operand.vmem [shape: f32[1,32], index: 4, kind: input, shape index: {}]
  %s5 = inlined_call_operand.vmem [shape: f32[32,11], index: 5, kind: input, shape index: {}]
  %s6 = inlined_call_operand.vmem [shape: f32[1,11], index: 6, kind: input, shape index: {}]
  %s7 = inlined_call_operand.hbm [shape: f32[8,32], index: 7, kind: output, shape index: {0}]
  %s8 = inlined_call_operand.hbm [shape: f32[8,11], index: 8, kind: output, shape index: {1}]
  %9 = xla_tuple %s7, %s8
  %s10 = sld [smem:[#allocation0]]
  $region50: #{tpu_custom_call.1} parent=0
    _
  %s12 = ssub.s32 1, %s10
  %s13 = scalar_select 0, %s12, %s10
  $region1: #{tpu_custom_call.1} parent=0
    #allocation2 [shape = 'u8[16384]{0}', space=vmem, size = 0x4000, scoped, tag = 'input window, operand 3, single buffered']
    #allocation3 [shape = 's32[1]{0}', space=sflag, size = 0x4, scoped, tag = 'scoped memory for tpu_custom_call.1']
    #allocation4 [shape = 's32[1]{0}', space=sflag, size = 0x4, scoped, tag = 'scoped memory for tpu_custom_call.1']
    #allocation5 [shape = 'u8[4096]{0}', space=vmem, size = 0x1000, scoped, tag = 'output window, operand 0, single buffered']
    #allocation6 [shape = 'u8[4096]{0}', space=vmem, size = 0x1000, scoped, tag = 'output window, operand 1, single buffered']
    #allocation7 [shape = 's32[1]{0}', space=sflag, size = 0x4, scoped, tag = 'scoped memory for tpu_custom_call.1']
    %14 = vsyncpa [#allocation3], 0
    %15 = vsyncpa [#allocation4], 0
    %16 = vsyncpa [#allocation7], 0
    // Predicated region
    $region2: #{tpu_custom_call.1} parent=1 // pred_check
      _
    $region3: #{tpu_custom_call.1} parent=1 // pred_check_branch
      %18 = sbr.rel (0) target = $region5
    $region4: #{tpu_custom_call.1} parent=1 // pred_region
      _
    $region5: #{tpu_custom_call.1} parent=1 // pred_fallthru
      _
    // Predicated region
    $region6: #{tpu_custom_call.1} parent=1 // pred_check
      _
    $region7: #{tpu_custom_call.1} parent=1 // pred_check_branch
      %20 = sbr.rel (0) target = $region9
    $region8: #{tpu_custom_call.1} parent=1 // pred_region
      _
    $region9: #{tpu_custom_call.1} parent=1 // pred_fallthru
      _
    // Predicated region
    $region10: #{tpu_custom_call.1} parent=1 // pred_check
      _
    $region11: #{tpu_custom_call.1} parent=1 // pred_check_branch
      %22 = sbr.rel (0) target = $region13
    $region12: #{tpu_custom_call.1} parent=1 // pred_region
      _
    $region13: #{tpu_custom_call.1} parent=1 // pred_fallthru
      _
    // Predicated region
    $region14: #{tpu_custom_call.1} parent=1 // pred_check
      _
    $region15: #{tpu_custom_call.1} parent=1 // pred_check_branch
      %24 = sbr.rel (0) target = $region17
    $region16: #{tpu_custom_call.1} parent=1 // pred_region
      %26 = vsyncadd [#allocation3], 0
      %s27 = sshll.u32 %s3, 4
      %s28 = int_to_ptr.hbm [resolvable:$true] %s27
      %s29 = sshll.u32 [#allocation2], 4
      %s30 = int_to_ptr.vmem [resolvable:$true] %s29
      %35 = dma.hbm_to_vmem [thread:$0]  %s28, 512, %s30, [#allocation3], 128, 128, 8
    $region17: #{tpu_custom_call.1} parent=1 // pred_fallthru
      _
    // Predicated region
    $region18: #{tpu_custom_call.1} parent=1 // pred_check
      _
    $region19: #{tpu_custom_call.1} parent=1 // pred_check_branch
      %37 = sbr.rel (0) target = $region21
    $region20: #{tpu_custom_call.1} parent=1 // pred_region
      _
    $region21: #{tpu_custom_call.1} parent=1 // pred_fallthru
      _
    // Predicated region
    $region22: #{tpu_custom_call.1} parent=1 // pred_check
      _
    $region23: #{tpu_custom_call.1} parent=1 // pred_check_branch
      %39 = sbr.rel (0) target = $region25
    $region24: #{tpu_custom_call.1} parent=1 // pred_region
      _
    $region25: #{tpu_custom_call.1} parent=1 // pred_fallthru
      _
    // Predicated region
    $region26: #{tpu_custom_call.1} parent=1 // pred_check
      _
    $region27: #{tpu_custom_call.1} parent=1 // pred_check_branch
      %41 = sbr.rel (0) target = $region29
    $region28: #{tpu_custom_call.1} parent=1 // pred_region
      _
    $region29: #{tpu_custom_call.1} parent=1 // pred_fallthru
      _
    // Predicated region
    $region30: #{tpu_custom_call.1} parent=1 // pred_check
      _
    $region31: #{tpu_custom_call.1} parent=1 // pred_check_branch
      %43 = sbr.rel (0) target = $region33
    $region32: #{tpu_custom_call.1} parent=1 // pred_region
      %45 = dma.done [#allocation3], 512
    $region33: #{tpu_custom_call.1} parent=1 // pred_fallthru
      _
    %v46 = vld [vmem:[%s0] sm:$0xff]
    %v47 = vld [vmem:[%s1] sm:$0xff]
    %v48 = vld [vmem:[%s1 + $0x8] sm:$0xff]
    %v49 = vld [vmem:[%s1 + $0x10] sm:$0xff]
    %v50 = vld [vmem:[%s1 + $0x18] sm:$0xff]
    %v51 = vld [vmem:[%s2] sm:$0x1]
    %v53 = vperm.slane %v51, 0
    %vm55 = vcmask 261120
    %v57 = vsel %vm55, %v46, 0
    %59 = vmatpush.msra.mxu0 0.0
    %60 = vmatpush.msra.mxu0 0.0
    %61 = vmatpush.msra.mxu0 0.0
    %62 = vmatpush.msra.mxu0 0.0
    %63 = vmatpush.msra.mxu0 0.0
    %64 = vmatpush.msra.mxu0 0.0
    %65 = vmatpush.msra.mxu0 0.0
    %66 = vmatpush.msra.mxu0 0.0
    %67 = vmatpush.msra.mxu0 0.0
    %68 = vmatpush.msra.mxu0 0.0
    %69 = vmatpush.msra.mxu0 0.0
    %70 = vmatpush.msra.mxu0 0.0
    %71 = vmatpush.msra.mxu0 %v50
    %72 = vmatpush.msra.mxu0 %v49
    %73 = vmatpush.msra.mxu0 %v48
    %74 = vmatpush.msra.mxu0 %v47
    %75 = vmatmul.f32.gmra.mxu0 %v57
    %v76 = vpop.f32.mrf.mxu0
    %v77 = vadd.f32 %v53, %v76
    %78 = vdwg.mxu0
    %v79 = vsel %vm55, %v77, -inf
    %80 = vmax.xlane.f32.xlu0 %v79
    %v81 = vpop.xlane.xlu0 %80
    %v82 = vsub.f32 %v77, %v81
    %v83 = vmul.f32 %v82, 1.442695
    %v84 = vpow.pop %v83
    %v85 = vsel %vm55, %v84, 0.0
    %86 = vadd.xlane.f32.xlu0 %v85
    %v87 = vpop.xlane.xlu0 %86
    %v88 = vrcp.pop %v87
    %v89 = vmul.f32 %v87, %v88
    %v90 = vsub.f32 1.0, %v89
    %v91 = vmul.f32 %v88, %v90
    %v92 = vadd.f32 %v88, %v91
    %vm93 = vweird.f32 %v87
    %vm94 = vweird.f32 %v88
    %vm95 = vmor %vm93, %vm94
    %v96 = vsel %vm95, %v88, %v92
    %v97 = vand.u32 2147483647, %v87
    %vm98 = vcmp.eq.f32.partialorder %v97, 8.507059e+37
    %v99 = vand.u32 %v87, 2147483648
    %v100 = vor.u32 1.1754944e-38, %v99
    %v101 = vsel %vm98, %v100, %v96
    %v102 = vmul.f32 %v84, %v101
    %v103 = vmul.f32 %v46, %v102
    %v104 = vld [vmem:[#allocation2] sm:$0xff]
    %v105 = vld [vmem:[#allocation2 + $0x8] sm:$0xff]
    %v106 = vld [vmem:[#allocation2 + $0x10] sm:$0xff]
    %v107 = vld [vmem:[#allocation2 + $0x18] sm:$0xff]
    %v108 = vld [vmem:[%s4] sm:$0x1]
    %v110 = vperm.slane %v108, 0
    %v113 = vsel %vm55, %v103, 0
    %115 = vmatpush.msra.mxu0 0.0
    %116 = vmatpush.msra.mxu0 0.0
    %117 = vmatpush.msra.mxu0 0.0
    %118 = vmatpush.msra.mxu0 0.0
    %119 = vmatpush.msra.mxu0 0.0
    %120 = vmatpush.msra.mxu0 0.0
    %121 = vmatpush.msra.mxu0 0.0
    %122 = vmatpush.msra.mxu0 0.0
    %123 = vmatpush.msra.mxu0 0.0
    %124 = vmatpush.msra.mxu0 0.0
    %125 = vmatpush.msra.mxu0 0.0
    %126 = vmatpush.msra.mxu0 0.0
    %127 = vmatpush.msra.mxu0 %v107
    %128 = vmatpush.msra.mxu0 %v106
    %129 = vmatpush.msra.mxu0 %v105
    %130 = vmatpush.msra.mxu0 %v104
    %131 = vmatmul.f32.gmra.mxu0 %v113
    %v132 = vpop.f32.mrf.mxu0
    %v133 = vadd.f32 %v110, %v132
    %134 = vdwg.mxu0
    %v135 = vmul.f32 %v133, 0.5
    %v136 = vmul.f32 %v133, 0.70710677
    %v137 = vmul.f32 %v136, %v136
    %v138 = vmin.f32 16.0, %v137
    %v139 = vmul.f32 %v138, 2.1237322e-06
    %v140 = vadd.f32 %v139, 0.00028619796
    %v141 = vmul.f32 %v138, %v140
    %v142 = vadd.f32 %v141, 0.0036580483
    %v143 = vmul.f32 %v138, %v142
    %v144 = vadd.f32 %v143, 0.05243302
    %v145 = vmul.f32 %v138, %v144
    %v146 = vadd.f32 %v145, 0.18741608
    %v147 = vmul.f32 %v138, %v146
    %v148 = vadd.f32 %v147, 1.1283791
    %v149 = vmul.f32 %v136, %v148
    %v150 = vmul.f32 %v138, 3.8918573e-05
    %v151 = vadd.f32 %v150, 0.001143296
    %v152 = vmul.f32 %v138, %v151
    %v153 = vadd.f32 %v152, 0.014752088
    %v154 = vmul.f32 %v138, %v153
    %v155 = vadd.f32 %v154, 0.112945676
    %v156 = vmul.f32 %v138, %v155
    %v157 = vadd.f32 %v156, 0.4994258
    %v158 = vmul.f32 %v138, %v157
    %v159 = vadd.f32 %v158, 1.0
    %v160 = vrcp.pop %v159
    %v161 = vmul.f32 %v159, %v160
    %v162 = vsub.f32 1.0, %v161
    %v163 = vmul.f32 %v160, %v162
    %v164 = vadd.f32 %v160, %v163
    %vm165 = vweird.f32 %v159
    %vm166 = vweird.f32 %v160
    %vm167 = vmor %vm165, %vm166
    %v168 = vsel %vm167, %v160, %v164
    %v169 = vand.u32 2147483647, %v159
    %vm170 = vcmp.eq.f32.partialorder %v169, 8.507059e+37
    %v171 = vand.u32 %v159, 2147483648
    %v172 = vor.u32 1.1754944e-38, %v171
    %v173 = vsel %vm170, %v172, %v168
    %v174 = vmul.f32 %v149, %v173
    %v175 = vmin.f32 %v174, 1.0
    %v176 = vmax.f32 %v175, -1.0
    %v177 = vadd.f32 %v176, 1.0
    %v178 = vmul.f32 %v135, %v177
    %v179 = vld [vmem:[%s5] sm:$0xff]
    %v180 = vld [vmem:[%s5 + $0x8] sm:$0xff]
    %v181 = vld [vmem:[%s5 + $0x10] sm:$0xff]
    %v182 = vld [vmem:[%s5 + $0x18] sm:$0xff]
    %v183 = vld [vmem:[%s6] sm:$0x1]
    %v185 = vperm.slane %v183, 0
    %v188 = vsel %vm55, %v178, 0
    %190 = vmatpush.msra.mxu0 0.0
    %191 = vmatpush.msra.mxu0 0.0
    %192 = vmatpush.msra.mxu0 0.0
    %193 = vmatpush.msra.mxu0 0.0
    %194 = vmatpush.msra.mxu0 0.0
    %195 = vmatpush.msra.mxu0 0.0
    %196 = vmatpush.msra.mxu0 0.0
    %197 = vmatpush.msra.mxu0 0.0
    %198 = vmatpush.msra.mxu0 0.0
    %199 = vmatpush.msra.mxu0 0.0
    %200 = vmatpush.msra.mxu0 0.0
    %201 = vmatpush.msra.mxu0 0.0
    %202 = vmatpush.msra.mxu0 %v182
    %203 = vmatpush.msra.mxu0 %v181
    %204 = vmatpush.msra.mxu0 %v180
    %205 = vmatpush.msra.mxu0 %v179
    %206 = vmatmul.f32.gmra.mxu0 %v188
    %v207 = vpop.f32.mrf.mxu0
    %v208 = vadd.f32 %v185, %v207
    %209 = vdwg.mxu0
    %210 = vst.msk [vmem:[#allocation5] sm:$0xff] %vm55, %v102
    %vm211 = vcmask 89088
    %212 = vst.msk [vmem:[#allocation6] sm:$0xff] %vm211, %v208
    // Predicated region
    $region34: #{tpu_custom_call.1} parent=1 // pred_check
      _
    $region35: #{tpu_custom_call.1} parent=1 // pred_check_branch
      %214 = sbr.rel (0) target = $region37
    $region36: #{tpu_custom_call.1} parent=1 // pred_region
      %216 = vsyncadd [#allocation4], 0
      %s218 = sshll.u32 [#allocation5], 4
      %s219 = int_to_ptr.vmem [resolvable:$true] %s218
      %s220 = sshll.u32 %s7, 4
      %s221 = int_to_ptr.hbm [resolvable:$true] %s220
      %223 = dma.vmem_to_hbm [thread:$0]  %s219, 128, %s221, [#allocation4]
    $region37: #{tpu_custom_call.1} parent=1 // pred_fallthru
      _
    // Predicated region
    $region38: #{tpu_custom_call.1} parent=1 // pred_check
      _
    $region39: #{tpu_custom_call.1} parent=1 // pred_check_branch
      %225 = sbr.rel (0) target = $region41
    $region40: #{tpu_custom_call.1} parent=1 // pred_region
      %227 = vsyncadd [#allocation7], 0
      %s229 = sshll.u32 [#allocation6], 4
      %s230 = int_to_ptr.vmem [resolvable:$true] %s229
      %s231 = sshll.u32 %s8, 4
      %s232 = int_to_ptr.hbm [resolvable:$true] %s231
      %234 = dma.vmem_to_hbm [thread:$0]  %s230, 128, %s232, [#allocation7]
    $region41: #{tpu_custom_call.1} parent=1 // pred_fallthru
      _
    // Predicated region
    $region42: #{tpu_custom_call.1} parent=1 // pred_check
      _
    $region43: #{tpu_custom_call.1} parent=1 // pred_check_branch
      %236 = sbr.rel (0) target = $region45
    $region44: #{tpu_custom_call.1} parent=1 // pred_region
      %238 = dma.done [#allocation4], 128
    $region45: #{tpu_custom_call.1} parent=1 // pred_fallthru
      _
    // Predicated region
    $region46: #{tpu_custom_call.1} parent=1 // pred_check
      _
    $region47: #{tpu_custom_call.1} parent=1 // pred_check_branch
      %240 = sbr.rel (0) target = $region49
    $region48: #{tpu_custom_call.1} parent=1 // pred_region
      %242 = dma.done [#allocation7], 128
    $region49: #{tpu_custom_call.1} parent=1 // pred_fallthru
      _
    %243 = vsyncpa [#allocation3], 1
    %244 = vsyncpa [#allocation4], 1
    %245 = vsyncpa [#allocation7], 1

</llo_original>
